<compile_context>
chip_gen: v5e
topology: v5e:2x2
jax: 0.10.0
libtpu: 0.0.40
codegen_flags: <defaults>
</compile_context>

<pallas_src>
import math
import functools

import jax
import jax.numpy as jnp
import numpy as np
from jax.experimental import pallas as pl
from jax.experimental.pallas import tpu as pltpu


def _round_up(v, m):
    return ((v + m - 1) // m) * m


def _spp_kernel(len_ref, x_ref, o_ref, *,
                num_levels, shift, pool_type, TB, LCHUNK, L, S_TOTAL, S_MXU):
    """One grid step = (batch tile, channel tile, lane chunk).

    len_ref : SMEM (n_i*TB,) int32 ragged lengths (scalar-prefetched)
    x_ref   : VMEM (TB, TC, LCHUNK) input tile (lane chunk of the spatial dim)
    o_ref   : VMEM (TB, TC, S_TOTAL) output tile, resident across the lane-chunk
              axis (accumulator): col (2**lv - 1 + j) holds level lv, segment j.
    """
    i = pl.program_id(0)                      # batch-tile index
    l = pl.program_id(2)                      # lane-chunk index (last, "arbitrary")
    n_l = pl.num_programs(2)
    chunk_lo = l * LCHUNK                     # global position of first lane here
    NEG = jnp.float32(-jnp.inf)

    # ---- init the resident output block once per (batch, channel) tile ----
    @pl.when(l == 0)
    def _():
        if pool_type == 'max_pool':
            o_ref[...] = jnp.full(o_ref.shape, NEG, dtype=o_ref.dtype)
        else:
            o_ref[...] = jnp.zeros(o_ref.shape, dtype=o_ref.dtype)

    # global spatial positions covered by this chunk (1, LCHUNK)
    lanes = chunk_lo + jax.lax.broadcasted_iota(jnp.int32, (1, LCHUNK), 1)
    if pool_type == 'avg_pool':
        col = jax.lax.broadcasted_iota(jnp.int32, (1, S_MXU), 1)
        pos = chunk_lo + jax.lax.broadcasted_iota(jnp.int32, (LCHUNK, S_MXU), 0)

    for bb in range(TB):
        # clip keeps padded / degenerate rows well-defined (their output is either
        # discarded by the masked writeback or duplicates segment 0, like torch
        # would only accept valid lengths anyway).
        length = jnp.clip(len_ref[i * TB + bb] - shift, 1, L)

        if pool_type == 'avg_pool':
            # -------- whole pyramid for this chunk as ONE matmul on the MXU -----
            # per-column (= per level/segment) window start and kernel size
            start_v = jnp.zeros((1, S_MXU), jnp.int32)
            kern_v = jnp.ones((1, S_MXU), jnp.int32)
            for lv in range(num_levels):
                nseg = 2 ** lv
                f = length.astype(jnp.float32) / float(nseg)   # exact (div by 2**lv)
                kern = jnp.ceil(f).astype(jnp.int32)
                stride = jnp.floor(f).astype(jnp.int32)
                in_lvl = (col >= nseg - 1) & (col < 2 * nseg - 1)
                j = col - (nseg - 1)
                start_v = jnp.where(in_lvl, j * stride, start_v)
                kern_v = jnp.where(in_lvl, kern, kern_v)

            @pl.when(chunk_lo < length)        # skip chunks past this sample's end
            def _():
                # zero out ragged / DMA-padding lanes so garbage (possibly NaN)
                # never multiplies into the sums.
                xs = jnp.where(lanes < length, x_ref[bb], 0.0)          # (TC, LCHUNK)
                mm = ((pos >= start_v) &
                      (pos < start_v + kern_v)).astype(jnp.float32)     # (LCHUNK, S_MXU)
                sums = jnp.dot(xs, mm, preferred_element_type=jnp.float32)
                o_ref[bb, :, :] = o_ref[bb, :, :] + sums[:, :S_TOTAL]

            @pl.when(l == n_l - 1)             # hoisted 1/kernel scale, once per row
            def _():
                inv = 1.0 / kern_v[:, :S_TOTAL].astype(jnp.float32)     # (1, S_TOTAL)
                o_ref[bb, :, :] = o_ref[bb, :, :] * inv

        else:  # ---------------------------- max_pool ---------------------------
            xc = x_ref[bb]                                              # (TC, LCHUNK)
            for lv in range(num_levels):
                nseg = 2 ** lv
                f = length.astype(jnp.float32) / float(nseg)
                kern = jnp.ceil(f).astype(jnp.int32)
                stride = jnp.floor(f).astype(jnp.int32)
                for j in range(nseg):
                    start = j * stride
                    colx = (nseg - 1) + j

                    # only do work if segment [start, start+kern) meets this chunk
                    @pl.when((start < chunk_lo + LCHUNK) & (start + kern > chunk_lo))
                    def _():
                        msk = (lanes >= start) & (lanes < start + kern)  # (1, LCHUNK)
                        seg = jnp.max(jnp.where(msk, xc, NEG),
                                      axis=1, keepdims=True)             # (TC, 1)
                        prev = o_ref[bb, :, colx:colx + 1]
                        o_ref[bb, :, colx:colx + 1] = jnp.maximum(prev, seg)


def spatial_pyramid_pool1d(x, orig_len=None, *, num_levels, shift=0,
                           pool_type='max_pool', batch_tile=8, channel_tile=None,
                           lane_chunk=512, vmem_limit_bytes=32 * 1024 * 1024,
                           interpret=False):
    """Pallas TPU implementation of SpatialPyramidPool1d.forward.

    x        : (N, C, L) float array (NCL, like the PyTorch module)
    orig_len : (N,) int ragged lengths (defaults to L)
    returns  : (N, C * (2**num_levels - 1)) float32, same ordering as the module.
    """
    if pool_type not in ('max_pool', 'avg_pool'):
        raise ValueError('unrecognized pool_type: %s' % pool_type)

    N, C, L = x.shape
    x = x.astype(jnp.float32)
    S_TOTAL = 2 ** num_levels - 1
    S_MXU = _round_up(S_TOTAL, 128)           # MXU-friendly mask width (avg path)

    if orig_len is None:
        orig_len = jnp.full((N,), L, dtype=jnp.int32)
    orig_len = orig_len.astype(jnp.int32)

    # ---------------- tile selection ----------------
    TB = max(1, min(int(batch_tile), N))                      # samples per step
    lane_chunk = max(128, _round_up(int(lane_chunk), 128))
    if _round_up(L, 128) <= lane_chunk:
        LCHUNK = L                                            # single full-row chunk
    else:
        LCHUNK = lane_chunk                                   # multiple of 128, <= L
    if channel_tile is None:
        per_buf = 6 * 1024 * 1024                             # ~6 MiB per input buffer
        channel_tile = max(8, per_buf // (TB * LCHUNK * 4))   # fits v5e/v6e/v7x VMEM
    if channel_tile >= C:
        TC = C
    else:
        TC = min(max(8, (int(channel_tile) // 8) * 8), C)

    n_i = -(-N // TB)
    n_c = -(-C // TC)
    n_l = -(-L // LCHUNK)

    # pad lengths so SMEM reads for batch-padded rows stay in range & benign
    pad_n = n_i * TB - N
    lens = jnp.pad(orig_len, (0, pad_n), constant_values=L) if pad_n else orig_len

    kernel = functools.partial(
        _spp_kernel, num_levels=num_levels, shift=shift, pool_type=pool_type,
        TB=TB, LCHUNK=LCHUNK, L=L, S_TOTAL=S_TOTAL, S_MXU=S_MXU)

    grid_spec = pltpu.PrefetchScalarGridSpec(
        num_scalar_prefetch=1,                                # lengths land in SMEM
        grid=(n_i, n_c, n_l),
        in_specs=[pl.BlockSpec((TB, TC, LCHUNK), lambda i, c, l, lens: (i, c, l))],
        out_specs=pl.BlockSpec((TB, TC, S_TOTAL), lambda i, c, l, lens: (i, c, 0)),
    )

    out_cs = pl.pallas_call(
        kernel,
        out_shape=jax.ShapeDtypeStruct((N, C, S_TOTAL), jnp.float32),
        grid_spec=grid_spec,
        compiler_params=pltpu.CompilerParams(
            dimension_semantics=("parallel", "parallel", "arbitrary"),
            vmem_limit_bytes=int(vmem_limit_bytes)),
        interpret=interpret,
    )(lens, x)

    # tiny flatten/reorder (done by XLA, not in-kernel relayouts):
    # (N, C, S_TOTAL) -> (N, C*(2**num_levels-1)), level-major / channel / segment.
    pieces = []
    s = 0
    for lv in range(num_levels):
        nseg = 2 ** lv
        pieces.append(out_cs[:, :, s:s + nseg].reshape(N, C * nseg))
        s += nseg
    return jnp.concatenate(pieces, axis=1)


def _ref_spp(x, orig_len, num_levels, shift=0, pool_type='max_pool'):
    """Pure-numpy port of the PyTorch module for verification."""
    x = np.asarray(x)
    orig_len = np.asarray(orig_len)
    N, C, _ = x.shape
    out = np.zeros((N, C * (2 ** num_levels - 1)), np.float32)
    for i in range(N):
        Li = int(orig_len[i]) - shift
        sample = x[i, :, :Li]
        f = float(Li)
        s = 0
        e = C
        for lv in range(num_levels):
            k = math.ceil(f)
            st = math.floor(f)
            nseg = 2 ** lv
            vals = np.zeros((C, nseg), np.float32)
            for j in range(nseg):
                w = sample[:, j * st:j * st + k]
                vals[:, j] = w.max(axis=1) if pool_type == 'max_pool' else w.mean(axis=1)
            out[i, s:s + e] = vals.reshape(e)
            s += e
            e *= 2
            f /= 2
    return out


if __name__ == "__main__":
    key = jax.random.PRNGKey(0)

    # --- config 1: small shapes, single chunk (module-sized example) ---
    N, C, L = 2, 4, 16
    num_levels = 3
    x = jax.random.normal(key, (N, C, L), dtype=jnp.float32)
    orig_len = jnp.array([16, 12], dtype=jnp.int32)   # ragged, pyramid-splittable

    for pt in ('max_pool', 'avg_pool'):
        out = spatial_pyramid_pool1d(x, orig_len, num_levels=num_levels,
                                     shift=0, pool_type=pt)
        out = jax.block_until_ready(out)
        ref = _ref_spp(np.asarray(x), np.asarray(orig_len), num_levels, 0, pt)
        np.testing.assert_allclose(np.asarray(out), ref, rtol=1e-5, atol=1e-5)

    # --- config 2: exercises multi-chunk accumulation, partial batch / lane blocks
    N2, C2, L2 = 3, 8, 400
    x2 = jax.random.normal(jax.random.PRNGKey(1), (N2, C2, L2), dtype=jnp.float32)
    orig_len2 = jnp.array([400, 256, 259], dtype=jnp.int32)
    for pt in ('max_pool', 'avg_pool'):
        out2 = spatial_pyramid_pool1d(x2, orig_len2, num_levels=3, shift=0,
                                      pool_type=pt, batch_tile=2, lane_chunk=128)
        out2 = jax.block_until_ready(out2)
        ref2 = _ref_spp(np.asarray(x2), np.asarray(orig_len2), 3, 0, pt)
        np.testing.assert_allclose(np.asarray(out2), ref2, rtol=1e-5, atol=1e-5)

    print("KERNEL_OK")
</pallas_src>

<mosaic_0001>
module attributes {stable_mosaic.version = 11 : i64} {
  func.func @_spp_kernel(%arg0: i32, %arg1: i32, %arg2: i32, %arg3: memref<2xi32, #tpu.memory_space<smem>>, %arg4: memref<2x4x16xf32, #tpu.memory_space<vmem>>, %arg5: memref<2x4x7xf32, #tpu.memory_space<vmem>>) attributes {dimension_semantics = [#tpu.dimension_semantics<parallel>, #tpu.dimension_semantics<parallel>, #tpu.dimension_semantics<arbitrary>], iteration_bounds = array<i64: 1, 1, 1>, scalar_prefetch = 1 : i64, scratch_operands = 0 : i64, tpu.core_type = #tpu.core_type<tc>, window_params = [{transform_indices = @transform_0, window_bounds = array<i64: 2, 4, 16>}, {transform_indices = @transform_1, window_bounds = array<i64: 2, 4, 7>}]} {
    %c16_i32 = arith.constant 16 : i32
    %0 = arith.muli %arg2, %c16_i32 : i32
    %c0_i32 = arith.constant 0 : i32
    %1 = arith.cmpi eq, %arg2, %c0_i32 : i32
    %2 = arith.extui %1 : i1 to i32
    %cst = arith.constant 0xFF800000 : f32
    %c0_i32_0 = arith.constant 0 : i32
    %3 = arith.cmpi ne, %2, %c0_i32_0 : i32
    scf.if %3 {
      %173 = vector.broadcast %cst : f32 to vector<2x4x7xf32>
      %c0_74 = arith.constant 0 : index
      %c0_75 = arith.constant 0 : index
      %c0_76 = arith.constant 0 : index
      %174 = vector.load %arg5[%c0_74, %c0_75, %c0_76] : memref<2x4x7xf32, #tpu.memory_space<vmem>>, vector<2x4x7xf32>
      tpu.vector_store %arg5[%c0_74, %c0_75, %c0_76], %173 {strides = array<i32>} : memref<2x4x7xf32, #tpu.memory_space<vmem>>, vector<2x4x7xf32>,
    } else {
    }
    %4 = tpu.iota {dimensions = array<i32: 1>} : vector<1x16xi32>
    %5 = vector.broadcast %0 : i32 to vector<1x16xi32>
    %6 = arith.addi %5, %4 : vector<1x16xi32>
    %c2_i32 = arith.constant 2 : i32
    %7 = arith.muli %arg0, %c2_i32 : i32
    %c0_i32_1 = arith.constant 0 : i32
    %8 = arith.addi %7, %c0_i32_1 : i32
    %9 = arith.index_cast %8 : i32 to index
    %10 = memref.load %arg3[%9] : memref<2xi32, #tpu.memory_space<smem>>
    %c0_i32_2 = arith.constant 0 : i32
    %11 = arith.subi %10, %c0_i32_2 : i32
    %c1_i32 = arith.constant 1 : i32
    %c16_i32_3 = arith.constant 16 : i32
    %12 = arith.maxsi %c1_i32, %11 : i32
    %13 = arith.minsi %c16_i32_3, %12 : i32
    %c0 = arith.constant 0 : index
    %c0_4 = arith.constant 0 : index
    %c0_5 = arith.constant 0 : index
    %14 = vector.load %arg4[%c0, %c0_4, %c0_5] : memref<2x4x16xf32, #tpu.memory_space<vmem>>, vector<1x4x16xf32>
    %15 = vector.shape_cast %14 : vector<1x4x16xf32> to vector<4x16xf32>
    %16 = arith.sitofp %13 : i32 to f32
    %cst_6 = arith.constant 1.000000e+00 : f32
    %17 = arith.divf %16, %cst_6 : f32
    %18 = math.ceil %17 : f32
    %19 = arith.fptosi %18 : f32 to i32
    %20 = math.floor %17 : f32
    %21 = arith.fptosi %20 : f32 to i32
    %c0_i32_7 = arith.constant 0 : i32
    %22 = arith.muli %c0_i32_7, %21 : i32
    %c16_i32_8 = arith.constant 16 : i32
    %23 = arith.addi %0, %c16_i32_8 : i32
    %24 = arith.cmpi slt, %22, %23 : i32
    %25 = arith.addi %22, %19 : i32
    %26 = arith.cmpi sgt, %25, %0 : i32
    %27 = arith.andi %24, %26 : i1
    %28 = arith.extui %27 : i1 to i32
    %cst_9 = arith.constant 0xFF800000 : f32
    %c0_i32_10 = arith.constant 0 : i32
    %29 = arith.cmpi ne, %28, %c0_i32_10 : i32
    scf.if %29 {
      %173 = vector.broadcast %22 : i32 to vector<1x16xi32>
      %174 = arith.cmpi sge, %6, %173 : vector<1x16xi32>
      %175 = arith.addi %22, %19 : i32
      %176 = vector.broadcast %175 : i32 to vector<1x16xi32>
      %177 = arith.cmpi slt, %6, %176 : vector<1x16xi32>
      %178 = arith.andi %174, %177 : vector<1x16xi1>
      %179 = vector.shape_cast %178 : vector<1x16xi1> to vector<1x16xi1>
      %180 = vector.broadcast %179 : vector<1x16xi1> to vector<4x16xi1>
      %181 = vector.broadcast %cst_9 : f32 to vector<4x16xf32>
      %182 = arith.select %180, %15, %181 : vector<4x16xi1>, vector<4x16xf32>
      %cst_74 = arith.constant dense<0xFF800000> : vector<4xf32>
      %183 = vector.multi_reduction <maximumf>, %182, %cst_74 [1] : vector<4x16xf32> to vector<4xf32>
      %184 = vector.shape_cast %183 : vector<4xf32> to vector<4x1xf32>
      %c0_75 = arith.constant 0 : index
      %c0_76 = arith.constant 0 : index
      %c0_77 = arith.constant 0 : index
      %185 = vector.load %arg5[%c0_75, %c0_76, %c0_77] : memref<2x4x7xf32, #tpu.memory_space<vmem>>, vector<1x4x1xf32>
      %186 = vector.shape_cast %185 : vector<1x4x1xf32> to vector<4x1xf32>
      %187 = arith.maximumf %186, %184 : vector<4x1xf32>
      %c0_78 = arith.constant 0 : index
      %c0_79 = arith.constant 0 : index
      %c0_80 = arith.constant 0 : index
      %188 = vector.load %arg5[%c0_78, %c0_79, %c0_80] : memref<2x4x7xf32, #tpu.memory_space<vmem>>, vector<1x4x1xf32>
      %189 = vector.shape_cast %188 : vector<1x4x1xf32> to vector<4x1xf32>
      %190 = vector.shape_cast %187 : vector<4x1xf32> to vector<1x4x1xf32>
      tpu.vector_store %arg5[%c0_78, %c0_79, %c0_80], %190 {strides = array<i32>} : memref<2x4x7xf32, #tpu.memory_space<vmem>>, vector<1x4x1xf32>,
    } else {
    }
    %30 = arith.sitofp %13 : i32 to f32
    %cst_11 = arith.constant 2.000000e+00 : f32
    %31 = arith.divf %30, %cst_11 : f32
    %32 = math.ceil %31 : f32
    %33 = arith.fptosi %32 : f32 to i32
    %34 = math.floor %31 : f32
    %35 = arith.fptosi %34 : f32 to i32
    %c0_i32_12 = arith.constant 0 : i32
    %36 = arith.muli %c0_i32_12, %35 : i32
    %c16_i32_13 = arith.constant 16 : i32
    %37 = arith.addi %0, %c16_i32_13 : i32
    %38 = arith.cmpi slt, %36, %37 : i32
    %39 = arith.addi %36, %33 : i32
    %40 = arith.cmpi sgt, %39, %0 : i32
    %41 = arith.andi %38, %40 : i1
    %42 = arith.extui %41 : i1 to i32
    %cst_14 = arith.constant 0xFF800000 : f32
    %c0_i32_15 = arith.constant 0 : i32
    %43 = arith.cmpi ne, %42, %c0_i32_15 : i32
    scf.if %43 {
      %173 = vector.broadcast %36 : i32 to vector<1x16xi32>
      %174 = arith.cmpi sge, %6, %173 : vector<1x16xi32>
      %175 = arith.addi %36, %33 : i32
      %176 = vector.broadcast %175 : i32 to vector<1x16xi32>
      %177 = arith.cmpi slt, %6, %176 : vector<1x16xi32>
      %178 = arith.andi %174, %177 : vector<1x16xi1>
      %179 = vector.shape_cast %178 : vector<1x16xi1> to vector<1x16xi1>
      %180 = vector.broadcast %179 : vector<1x16xi1> to vector<4x16xi1>
      %181 = vector.broadcast %cst_14 : f32 to vector<4x16xf32>
      %182 = arith.select %180, %15, %181 : vector<4x16xi1>, vector<4x16xf32>
      %cst_74 = arith.constant dense<0xFF800000> : vector<4xf32>
      %183 = vector.multi_reduction <maximumf>, %182, %cst_74 [1] : vector<4x16xf32> to vector<4xf32>
      %184 = vector.shape_cast %183 : vector<4xf32> to vector<4x1xf32>
      %c0_75 = arith.constant 0 : index
      %c0_76 = arith.constant 0 : index
      %c1_77 = arith.constant 1 : index
      %185 = vector.load %arg5[%c0_75, %c0_76, %c1_77] : memref<2x4x7xf32, #tpu.memory_space<vmem>>, vector<1x4x1xf32>
      %186 = vector.shape_cast %185 : vector<1x4x1xf32> to vector<4x1xf32>
      %187 = arith.maximumf %186, %184 : vector<4x1xf32>
      %c0_78 = arith.constant 0 : index
      %c0_79 = arith.constant 0 : index
      %c1_80 = arith.constant 1 : index
      %188 = vector.load %arg5[%c0_78, %c0_79, %c1_80] : memref<2x4x7xf32, #tpu.memory_space<vmem>>, vector<1x4x1xf32>
      %189 = vector.shape_cast %188 : vector<1x4x1xf32> to vector<4x1xf32>
      %190 = vector.shape_cast %187 : vector<4x1xf32> to vector<1x4x1xf32>
      tpu.vector_store %arg5[%c0_78, %c0_79, %c1_80], %190 {strides = array<i32>} : memref<2x4x7xf32, #tpu.memory_space<vmem>>, vector<1x4x1xf32>,
    } else {
    }
    %c1_i32_16 = arith.constant 1 : i32
    %44 = arith.muli %c1_i32_16, %35 : i32
    %c16_i32_17 = arith.constant 16 : i32
    %45 = arith.addi %0, %c16_i32_17 : i32
    %46 = arith.cmpi slt, %44, %45 : i32
    %47 = arith.addi %44, %33 : i32
    %48 = arith.cmpi sgt, %47, %0 : i32
    %49 = arith.andi %46, %48 : i1
    %50 = arith.extui %49 : i1 to i32
    %cst_18 = arith.constant 0xFF800000 : f32
    %c0_i32_19 = arith.constant 0 : i32
    %51 = arith.cmpi ne, %50, %c0_i32_19 : i32
    scf.if %51 {
      %173 = vector.broadcast %44 : i32 to vector<1x16xi32>
      %174 = arith.cmpi sge, %6, %173 : vector<1x16xi32>
      %175 = arith.addi %44, %33 : i32
      %176 = vector.broadcast %175 : i32 to vector<1x16xi32>
      %177 = arith.cmpi slt, %6, %176 : vector<1x16xi32>
      %178 = arith.andi %174, %177 : vector<1x16xi1>
      %179 = vector.shape_cast %178 : vector<1x16xi1> to vector<1x16xi1>
      %180 = vector.broadcast %179 : vector<1x16xi1> to vector<4x16xi1>
      %181 = vector.broadcast %cst_18 : f32 to vector<4x16xf32>
      %182 = arith.select %180, %15, %181 : vector<4x16xi1>, vector<4x16xf32>
      %cst_74 = arith.constant dense<0xFF800000> : vector<4xf32>
      %183 = vector.multi_reduction <maximumf>, %182, %cst_74 [1] : vector<4x16xf32> to vector<4xf32>
      %184 = vector.shape_cast %183 : vector<4xf32> to vector<4x1xf32>
      %c0_75 = arith.constant 0 : index
      %c0_76 = arith.constant 0 : index
      %c2 = arith.constant 2 : index
      %185 = vector.load %arg5[%c0_75, %c0_76, %c2] : memref<2x4x7xf32, #tpu.memory_space<vmem>>, vector<1x4x1xf32>
      %186 = vector.shape_cast %185 : vector<1x4x1xf32> to vector<4x1xf32>
      %187 = arith.maximumf %186, %184 : vector<4x1xf32>
      %c0_77 = arith.constant 0 : index
      %c0_78 = arith.constant 0 : index
      %c2_79 = arith.constant 2 : index
      %188 = vector.load %arg5[%c0_77, %c0_78, %c2_79] : memref<2x4x7xf32, #tpu.memory_space<vmem>>, vector<1x4x1xf32>
      %189 = vector.shape_cast %188 : vector<1x4x1xf32> to vector<4x1xf32>
      %190 = vector.shape_cast %187 : vector<4x1xf32> to vector<1x4x1xf32>
      tpu.vector_store %arg5[%c0_77, %c0_78, %c2_79], %190 {strides = array<i32>} : memref<2x4x7xf32, #tpu.memory_space<vmem>>, vector<1x4x1xf32>,
    } else {
    }
    %52 = arith.sitofp %13 : i32 to f32
    %cst_20 = arith.constant 4.000000e+00 : f32
    %53 = arith.divf %52, %cst_20 : f32
    %54 = math.ceil %53 : f32
    %55 = arith.fptosi %54 : f32 to i32
    %56 = math.floor %53 : f32
    %57 = arith.fptosi %56 : f32 to i32
    %c0_i32_21 = arith.constant 0 : i32
    %58 = arith.muli %c0_i32_21, %57 : i32
    %c16_i32_22 = arith.constant 16 : i32
    %59 = arith.addi %0, %c16_i32_22 : i32
    %60 = arith.cmpi slt, %58, %59 : i32
    %61 = arith.addi %58, %55 : i32
    %62 = arith.cmpi sgt, %61, %0 : i32
    %63 = arith.andi %60, %62 : i1
    %64 = arith.extui %63 : i1 to i32
    %cst_23 = arith.constant 0xFF800000 : f32
    %c0_i32_24 = arith.constant 0 : i32
    %65 = arith.cmpi ne, %64, %c0_i32_24 : i32
    scf.if %65 {
      %173 = vector.broadcast %58 : i32 to vector<1x16xi32>
      %174 = arith.cmpi sge, %6, %173 : vector<1x16xi32>
      %175 = arith.addi %58, %55 : i32
      %176 = vector.broadcast %175 : i32 to vector<1x16xi32>
      %177 = arith.cmpi slt, %6, %176 : vector<1x16xi32>
      %178 = arith.andi %174, %177 : vector<1x16xi1>
      %179 = vector.shape_cast %178 : vector<1x16xi1> to vector<1x16xi1>
      %180 = vector.broadcast %179 : vector<1x16xi1> to vector<4x16xi1>
      %181 = vector.broadcast %cst_23 : f32 to vector<4x16xf32>
      %182 = arith.select %180, %15, %181 : vector<4x16xi1>, vector<4x16xf32>
      %cst_74 = arith.constant dense<0xFF800000> : vector<4xf32>
      %183 = vector.multi_reduction <maximumf>, %182, %cst_74 [1] : vector<4x16xf32> to vector<4xf32>
      %184 = vector.shape_cast %183 : vector<4xf32> to vector<4x1xf32>
      %c0_75 = arith.constant 0 : index
      %c0_76 = arith.constant 0 : index
      %c3 = arith.constant 3 : index
      %185 = vector.load %arg5[%c0_75, %c0_76, %c3] : memref<2x4x7xf32, #tpu.memory_space<vmem>>, vector<1x4x1xf32>
      %186 = vector.shape_cast %185 : vector<1x4x1xf32> to vector<4x1xf32>
      %187 = arith.maximumf %186, %184 : vector<4x1xf32>
      %c0_77 = arith.constant 0 : index
      %c0_78 = arith.constant 0 : index
      %c3_79 = arith.constant 3 : index
      %188 = vector.load %arg5[%c0_77, %c0_78, %c3_79] : memref<2x4x7xf32, #tpu.memory_space<vmem>>, vector<1x4x1xf32>
      %189 = vector.shape_cast %188 : vector<1x4x1xf32> to vector<4x1xf32>
      %190 = vector.shape_cast %187 : vector<4x1xf32> to vector<1x4x1xf32>
      tpu.vector_store %arg5[%c0_77, %c0_78, %c3_79], %190 {strides = array<i32>} : memref<2x4x7xf32, #tpu.memory_space<vmem>>, vector<1x4x1xf32>,
    } else {
    }
    %c1_i32_25 = arith.constant 1 : i32
    %66 = arith.muli %c1_i32_25, %57 : i32
    %c16_i32_26 = arith.constant 16 : i32
    %67 = arith.addi %0, %c16_i32_26 : i32
    %68 = arith.cmpi slt, %66, %67 : i32
    %69 = arith.addi %66, %55 : i32
    %70 = arith.cmpi sgt, %69, %0 : i32
    %71 = arith.andi %68, %70 : i1
    %72 = arith.extui %71 : i1 to i32
    %cst_27 = arith.constant 0xFF800000 : f32
    %c0_i32_28 = arith.constant 0 : i32
    %73 = arith.cmpi ne, %72, %c0_i32_28 : i32
    scf.if %73 {
      %173 = vector.broadcast %66 : i32 to vector<1x16xi32>
      %174 = arith.cmpi sge, %6, %173 : vector<1x16xi32>
      %175 = arith.addi %66, %55 : i32
      %176 = vector.broadcast %175 : i32 to vector<1x16xi32>
      %177 = arith.cmpi slt, %6, %176 : vector<1x16xi32>
      %178 = arith.andi %174, %177 : vector<1x16xi1>
      %179 = vector.shape_cast %178 : vector<1x16xi1> to vector<1x16xi1>
      %180 = vector.broadcast %179 : vector<1x16xi1> to vector<4x16xi1>
      %181 = vector.broadcast %cst_27 : f32 to vector<4x16xf32>
      %182 = arith.select %180, %15, %181 : vector<4x16xi1>, vector<4x16xf32>
      %cst_74 = arith.constant dense<0xFF800000> : vector<4xf32>
      %183 = vector.multi_reduction <maximumf>, %182, %cst_74 [1] : vector<4x16xf32> to vector<4xf32>
      %184 = vector.shape_cast %183 : vector<4xf32> to vector<4x1xf32>
      %c0_75 = arith.constant 0 : index
      %c0_76 = arith.constant 0 : index
      %c4 = arith.constant 4 : index
      %185 = vector.load %arg5[%c0_75, %c0_76, %c4] : memref<2x4x7xf32, #tpu.memory_space<vmem>>, vector<1x4x1xf32>
      %186 = vector.shape_cast %185 : vector<1x4x1xf32> to vector<4x1xf32>
      %187 = arith.maximumf %186, %184 : vector<4x1xf32>
      %c0_77 = arith.constant 0 : index
      %c0_78 = arith.constant 0 : index
      %c4_79 = arith.constant 4 : index
      %188 = vector.load %arg5[%c0_77, %c0_78, %c4_79] : memref<2x4x7xf32, #tpu.memory_space<vmem>>, vector<1x4x1xf32>
      %189 = vector.shape_cast %188 : vector<1x4x1xf32> to vector<4x1xf32>
      %190 = vector.shape_cast %187 : vector<4x1xf32> to vector<1x4x1xf32>
      tpu.vector_store %arg5[%c0_77, %c0_78, %c4_79], %190 {strides = array<i32>} : memref<2x4x7xf32, #tpu.memory_space<vmem>>, vector<1x4x1xf32>,
    } else {
    }
    %c2_i32_29 = arith.constant 2 : i32
    %74 = arith.muli %c2_i32_29, %57 : i32
    %c16_i32_30 = arith.constant 16 : i32
    %75 = arith.addi %0, %c16_i32_30 : i32
    %76 = arith.cmpi slt, %74, %75 : i32
    %77 = arith.addi %74, %55 : i32
    %78 = arith.cmpi sgt, %77, %0 : i32
    %79 = arith.andi %76, %78 : i1
    %80 = arith.extui %79 : i1 to i32
    %cst_31 = arith.constant 0xFF800000 : f32
    %c0_i32_32 = arith.constant 0 : i32
    %81 = arith.cmpi ne, %80, %c0_i32_32 : i32
    scf.if %81 {
      %173 = vector.broadcast %74 : i32 to vector<1x16xi32>
      %174 = arith.cmpi sge, %6, %173 : vector<1x16xi32>
      %175 = arith.addi %74, %55 : i32
      %176 = vector.broadcast %175 : i32 to vector<1x16xi32>
      %177 = arith.cmpi slt, %6, %176 : vector<1x16xi32>
      %178 = arith.andi %174, %177 : vector<1x16xi1>
      %179 = vector.shape_cast %178 : vector<1x16xi1> to vector<1x16xi1>
      %180 = vector.broadcast %179 : vector<1x16xi1> to vector<4x16xi1>
      %181 = vector.broadcast %cst_31 : f32 to vector<4x16xf32>
      %182 = arith.select %180, %15, %181 : vector<4x16xi1>, vector<4x16xf32>
      %cst_74 = arith.constant dense<0xFF800000> : vector<4xf32>
      %183 = vector.multi_reduction <maximumf>, %182, %cst_74 [1] : vector<4x16xf32> to vector<4xf32>
      %184 = vector.shape_cast %183 : vector<4xf32> to vector<4x1xf32>
      %c0_75 = arith.constant 0 : index
      %c0_76 = arith.constant 0 : index
      %c5 = arith.constant 5 : index
      %185 = vector.load %arg5[%c0_75, %c0_76, %c5] : memref<2x4x7xf32, #tpu.memory_space<vmem>>, vector<1x4x1xf32>
      %186 = vector.shape_cast %185 : vector<1x4x1xf32> to vector<4x1xf32>
      %187 = arith.maximumf %186, %184 : vector<4x1xf32>
      %c0_77 = arith.constant 0 : index
      %c0_78 = arith.constant 0 : index
      %c5_79 = arith.constant 5 : index
      %188 = vector.load %arg5[%c0_77, %c0_78, %c5_79] : memref<2x4x7xf32, #tpu.memory_space<vmem>>, vector<1x4x1xf32>
      %189 = vector.shape_cast %188 : vector<1x4x1xf32> to vector<4x1xf32>
      %190 = vector.shape_cast %187 : vector<4x1xf32> to vector<1x4x1xf32>
      tpu.vector_store %arg5[%c0_77, %c0_78, %c5_79], %190 {strides = array<i32>} : memref<2x4x7xf32, #tpu.memory_space<vmem>>, vector<1x4x1xf32>,
    } else {
    }
    %c3_i32 = arith.constant 3 : i32
    %82 = arith.muli %c3_i32, %57 : i32
    %c16_i32_33 = arith.constant 16 : i32
    %83 = arith.addi %0, %c16_i32_33 : i32
    %84 = arith.cmpi slt, %82, %83 : i32
    %85 = arith.addi %82, %55 : i32
    %86 = arith.cmpi sgt, %85, %0 : i32
    %87 = arith.andi %84, %86 : i1
    %88 = arith.extui %87 : i1 to i32
    %cst_34 = arith.constant 0xFF800000 : f32
    %c0_i32_35 = arith.constant 0 : i32
    %89 = arith.cmpi ne, %88, %c0_i32_35 : i32
    scf.if %89 {
      %173 = vector.broadcast %82 : i32 to vector<1x16xi32>
      %174 = arith.cmpi sge, %6, %173 : vector<1x16xi32>
      %175 = arith.addi %82, %55 : i32
      %176 = vector.broadcast %175 : i32 to vector<1x16xi32>
      %177 = arith.cmpi slt, %6, %176 : vector<1x16xi32>
      %178 = arith.andi %174, %177 : vector<1x16xi1>
      %179 = vector.shape_cast %178 : vector<1x16xi1> to vector<1x16xi1>
      %180 = vector.broadcast %179 : vector<1x16xi1> to vector<4x16xi1>
      %181 = vector.broadcast %cst_34 : f32 to vector<4x16xf32>
      %182 = arith.select %180, %15, %181 : vector<4x16xi1>, vector<4x16xf32>
      %cst_74 = arith.constant dense<0xFF800000> : vector<4xf32>
      %183 = vector.multi_reduction <maximumf>, %182, %cst_74 [1] : vector<4x16xf32> to vector<4xf32>
      %184 = vector.shape_cast %183 : vector<4xf32> to vector<4x1xf32>
      %c0_75 = arith.constant 0 : index
      %c0_76 = arith.constant 0 : index
      %c6 = arith.constant 6 : index
      %185 = vector.load %arg5[%c0_75, %c0_76, %c6] : memref<2x4x7xf32, #tpu.memory_space<vmem>>, vector<1x4x1xf32>
      %186 = vector.shape_cast %185 : vector<1x4x1xf32> to vector<4x1xf32>
      %187 = arith.maximumf %186, %184 : vector<4x1xf32>
      %c0_77 = arith.constant 0 : index
      %c0_78 = arith.constant 0 : index
      %c6_79 = arith.constant 6 : index
      %188 = vector.load %arg5[%c0_77, %c0_78, %c6_79] : memref<2x4x7xf32, #tpu.memory_space<vmem>>, vector<1x4x1xf32>
      %189 = vector.shape_cast %188 : vector<1x4x1xf32> to vector<4x1xf32>
      %190 = vector.shape_cast %187 : vector<4x1xf32> to vector<1x4x1xf32>
      tpu.vector_store %arg5[%c0_77, %c0_78, %c6_79], %190 {strides = array<i32>} : memref<2x4x7xf32, #tpu.memory_space<vmem>>, vector<1x4x1xf32>,
    } else {
    }
    %c2_i32_36 = arith.constant 2 : i32
    %90 = arith.muli %arg0, %c2_i32_36 : i32
    %c1_i32_37 = arith.constant 1 : i32
    %91 = arith.addi %90, %c1_i32_37 : i32
    %92 = arith.index_cast %91 : i32 to index
    %93 = memref.load %arg3[%92] : memref<2xi32, #tpu.memory_space<smem>>
    %c0_i32_38 = arith.constant 0 : i32
    %94 = arith.subi %93, %c0_i32_38 : i32
    %c1_i32_39 = arith.constant 1 : i32
    %c16_i32_40 = arith.constant 16 : i32
    %95 = arith.maxsi %c1_i32_39, %94 : i32
    %96 = arith.minsi %c16_i32_40, %95 : i32
    %c1 = arith.constant 1 : index
    %c0_41 = arith.constant 0 : index
    %c0_42 = arith.constant 0 : index
    %97 = vector.load %arg4[%c1, %c0_41, %c0_42] : memref<2x4x16xf32, #tpu.memory_space<vmem>>, vector<1x4x16xf32>
    %98 = vector.shape_cast %97 : vector<1x4x16xf32> to vector<4x16xf32>
    %99 = arith.sitofp %96 : i32 to f32
    %cst_43 = arith.constant 1.000000e+00 : f32
    %100 = arith.divf %99, %cst_43 : f32
    %101 = math.ceil %100 : f32
    %102 = arith.fptosi %101 : f32 to i32
    %103 = math.floor %100 : f32
    %104 = arith.fptosi %103 : f32 to i32
    %c0_i32_44 = arith.constant 0 : i32
    %105 = arith.muli %c0_i32_44, %104 : i32
    %c16_i32_45 = arith.constant 16 : i32
    %106 = arith.addi %0, %c16_i32_45 : i32
    %107 = arith.cmpi slt, %105, %106 : i32
    %108 = arith.addi %105, %102 : i32
    %109 = arith.cmpi sgt, %108, %0 : i32
    %110 = arith.andi %107, %109 : i1
    %111 = arith.extui %110 : i1 to i32
    %cst_46 = arith.constant 0xFF800000 : f32
    %c0_i32_47 = arith.constant 0 : i32
    %112 = arith.cmpi ne, %111, %c0_i32_47 : i32
    scf.if %112 {
      %173 = vector.broadcast %105 : i32 to vector<1x16xi32>
      %174 = arith.cmpi sge, %6, %173 : vector<1x16xi32>
      %175 = arith.addi %105, %102 : i32
      %176 = vector.broadcast %175 : i32 to vector<1x16xi32>
      %177 = arith.cmpi slt, %6, %176 : vector<1x16xi32>
      %178 = arith.andi %174, %177 : vector<1x16xi1>
      %179 = vector.shape_cast %178 : vector<1x16xi1> to vector<1x16xi1>
      %180 = vector.broadcast %179 : vector<1x16xi1> to vector<4x16xi1>
      %181 = vector.broadcast %cst_46 : f32 to vector<4x16xf32>
      %182 = arith.select %180, %98, %181 : vector<4x16xi1>, vector<4x16xf32>
      %cst_74 = arith.constant dense<0xFF800000> : vector<4xf32>
      %183 = vector.multi_reduction <maximumf>, %182, %cst_74 [1] : vector<4x16xf32> to vector<4xf32>
      %184 = vector.shape_cast %183 : vector<4xf32> to vector<4x1xf32>
      %c1_75 = arith.constant 1 : index
      %c0_76 = arith.constant 0 : index
      %c0_77 = arith.constant 0 : index
      %185 = vector.load %arg5[%c1_75, %c0_76, %c0_77] : memref<2x4x7xf32, #tpu.memory_space<vmem>>, vector<1x4x1xf32>
      %186 = vector.shape_cast %185 : vector<1x4x1xf32> to vector<4x1xf32>
      %187 = arith.maximumf %186, %184 : vector<4x1xf32>
      %c1_78 = arith.constant 1 : index
      %c0_79 = arith.constant 0 : index
      %c0_80 = arith.constant 0 : index
      %188 = vector.load %arg5[%c1_78, %c0_79, %c0_80] : memref<2x4x7xf32, #tpu.memory_space<vmem>>, vector<1x4x1xf32>
      %189 = vector.shape_cast %188 : vector<1x4x1xf32> to vector<4x1xf32>
      %190 = vector.shape_cast %187 : vector<4x1xf32> to vector<1x4x1xf32>
      tpu.vector_store %arg5[%c1_78, %c0_79, %c0_80], %190 {strides = array<i32>} : memref<2x4x7xf32, #tpu.memory_space<vmem>>, vector<1x4x1xf32>,
    } else {
    }
    %113 = arith.sitofp %96 : i32 to f32
    %cst_48 = arith.constant 2.000000e+00 : f32
    %114 = arith.divf %113, %cst_48 : f32
    %115 = math.ceil %114 : f32
    %116 = arith.fptosi %115 : f32 to i32
    %117 = math.floor %114 : f32
    %118 = arith.fptosi %117 : f32 to i32
    %c0_i32_49 = arith.constant 0 : i32
    %119 = arith.muli %c0_i32_49, %118 : i32
    %c16_i32_50 = arith.constant 16 : i32
    %120 = arith.addi %0, %c16_i32_50 : i32
    %121 = arith.cmpi slt, %119, %120 : i32
    %122 = arith.addi %119, %116 : i32
    %123 = arith.cmpi sgt, %122, %0 : i32
    %124 = arith.andi %121, %123 : i1
    %125 = arith.extui %124 : i1 to i32
    %cst_51 = arith.constant 0xFF800000 : f32
    %c0_i32_52 = arith.constant 0 : i32
    %126 = arith.cmpi ne, %125, %c0_i32_52 : i32
    scf.if %126 {
      %173 = vector.broadcast %119 : i32 to vector<1x16xi32>
      %174 = arith.cmpi sge, %6, %173 : vector<1x16xi32>
      %175 = arith.addi %119, %116 : i32
      %176 = vector.broadcast %175 : i32 to vector<1x16xi32>
      %177 = arith.cmpi slt, %6, %176 : vector<1x16xi32>
      %178 = arith.andi %174, %177 : vector<1x16xi1>
      %179 = vector.shape_cast %178 : vector<1x16xi1> to vector<1x16xi1>
      %180 = vector.broadcast %179 : vector<1x16xi1> to vector<4x16xi1>
      %181 = vector.broadcast %cst_51 : f32 to vector<4x16xf32>
      %182 = arith.select %180, %98, %181 : vector<4x16xi1>, vector<4x16xf32>
      %cst_74 = arith.constant dense<0xFF800000> : vector<4xf32>
      %183 = vector.multi_reduction <maximumf>, %182, %cst_74 [1] : vector<4x16xf32> to vector<4xf32>
      %184 = vector.shape_cast %183 : vector<4xf32> to vector<4x1xf32>
      %c1_75 = arith.constant 1 : index
      %c0_76 = arith.constant 0 : index
      %c1_77 = arith.constant 1 : index
      %185 = vector.load %arg5[%c1_75, %c0_76, %c1_77] : memref<2x4x7xf32, #tpu.memory_space<vmem>>, vector<1x4x1xf32>
      %186 = vector.shape_cast %185 : vector<1x4x1xf32> to vector<4x1xf32>
      %187 = arith.maximumf %186, %184 : vector<4x1xf32>
      %c1_78 = arith.constant 1 : index
      %c0_79 = arith.constant 0 : index
      %c1_80 = arith.constant 1 : index
      %188 = vector.load %arg5[%c1_78, %c0_79, %c1_80] : memref<2x4x7xf32, #tpu.memory_space<vmem>>, vector<1x4x1xf32>
      %189 = vector.shape_cast %188 : vector<1x4x1xf32> to vector<4x1xf32>
      %190 = vector.shape_cast %187 : vector<4x1xf32> to vector<1x4x1xf32>
      tpu.vector_store %arg5[%c1_78, %c0_79, %c1_80], %190 {strides = array<i32>} : memref<2x4x7xf32, #tpu.memory_space<vmem>>, vector<1x4x1xf32>,
    } else {
    }
    %c1_i32_53 = arith.constant 1 : i32
    %127 = arith.muli %c1_i32_53, %118 : i32
    %c16_i32_54 = arith.constant 16 : i32
    %128 = arith.addi %0, %c16_i32_54 : i32
    %129 = arith.cmpi slt, %127, %128 : i32
    %130 = arith.addi %127, %116 : i32
    %131 = arith.cmpi sgt, %130, %0 : i32
    %132 = arith.andi %129, %131 : i1
    %133 = arith.extui %132 : i1 to i32
    %cst_55 = arith.constant 0xFF800000 : f32
    %c0_i32_56 = arith.constant 0 : i32
    %134 = arith.cmpi ne, %133, %c0_i32_56 : i32
    scf.if %134 {
      %173 = vector.broadcast %127 : i32 to vector<1x16xi32>
      %174 = arith.cmpi sge, %6, %173 : vector<1x16xi32>
      %175 = arith.addi %127, %116 : i32
      %176 = vector.broadcast %175 : i32 to vector<1x16xi32>
      %177 = arith.cmpi slt, %6, %176 : vector<1x16xi32>
      %178 = arith.andi %174, %177 : vector<1x16xi1>
      %179 = vector.shape_cast %178 : vector<1x16xi1> to vector<1x16xi1>
      %180 = vector.broadcast %179 : vector<1x16xi1> to vector<4x16xi1>
      %181 = vector.broadcast %cst_55 : f32 to vector<4x16xf32>
      %182 = arith.select %180, %98, %181 : vector<4x16xi1>, vector<4x16xf32>
      %cst_74 = arith.constant dense<0xFF800000> : vector<4xf32>
      %183 = vector.multi_reduction <maximumf>, %182, %cst_74 [1] : vector<4x16xf32> to vector<4xf32>
      %184 = vector.shape_cast %183 : vector<4xf32> to vector<4x1xf32>
      %c1_75 = arith.constant 1 : index
      %c0_76 = arith.constant 0 : index
      %c2 = arith.constant 2 : index
      %185 = vector.load %arg5[%c1_75, %c0_76, %c2] : memref<2x4x7xf32, #tpu.memory_space<vmem>>, vector<1x4x1xf32>
      %186 = vector.shape_cast %185 : vector<1x4x1xf32> to vector<4x1xf32>
      %187 = arith.maximumf %186, %184 : vector<4x1xf32>
      %c1_77 = arith.constant 1 : index
      %c0_78 = arith.constant 0 : index
      %c2_79 = arith.constant 2 : index
      %188 = vector.load %arg5[%c1_77, %c0_78, %c2_79] : memref<2x4x7xf32, #tpu.memory_space<vmem>>, vector<1x4x1xf32>
      %189 = vector.shape_cast %188 : vector<1x4x1xf32> to vector<4x1xf32>
      %190 = vector.shape_cast %187 : vector<4x1xf32> to vector<1x4x1xf32>
      tpu.vector_store %arg5[%c1_77, %c0_78, %c2_79], %190 {strides = array<i32>} : memref<2x4x7xf32, #tpu.memory_space<vmem>>, vector<1x4x1xf32>,
    } else {
    }
    %135 = arith.sitofp %96 : i32 to f32
    %cst_57 = arith.constant 4.000000e+00 : f32
    %136 = arith.divf %135, %cst_57 : f32
    %137 = math.ceil %136 : f32
    %138 = arith.fptosi %137 : f32 to i32
    %139 = math.floor %136 : f32
    %140 = arith.fptosi %139 : f32 to i32
    %c0_i32_58 = arith.constant 0 : i32
    %141 = arith.muli %c0_i32_58, %140 : i32
    %c16_i32_59 = arith.constant 16 : i32
    %142 = arith.addi %0, %c16_i32_59 : i32
    %143 = arith.cmpi slt, %141, %142 : i32
    %144 = arith.addi %141, %138 : i32
    %145 = arith.cmpi sgt, %144, %0 : i32
    %146 = arith.andi %143, %145 : i1
    %147 = arith.extui %146 : i1 to i32
    %cst_60 = arith.constant 0xFF800000 : f32
    %c0_i32_61 = arith.constant 0 : i32
    %148 = arith.cmpi ne, %147, %c0_i32_61 : i32
    scf.if %148 {
      %173 = vector.broadcast %141 : i32 to vector<1x16xi32>
      %174 = arith.cmpi sge, %6, %173 : vector<1x16xi32>
      %175 = arith.addi %141, %138 : i32
      %176 = vector.broadcast %175 : i32 to vector<1x16xi32>
      %177 = arith.cmpi slt, %6, %176 : vector<1x16xi32>
      %178 = arith.andi %174, %177 : vector<1x16xi1>
      %179 = vector.shape_cast %178 : vector<1x16xi1> to vector<1x16xi1>
      %180 = vector.broadcast %179 : vector<1x16xi1> to vector<4x16xi1>
      %181 = vector.broadcast %cst_60 : f32 to vector<4x16xf32>
      %182 = arith.select %180, %98, %181 : vector<4x16xi1>, vector<4x16xf32>
      %cst_74 = arith.constant dense<0xFF800000> : vector<4xf32>
      %183 = vector.multi_reduction <maximumf>, %182, %cst_74 [1] : vector<4x16xf32> to vector<4xf32>
      %184 = vector.shape_cast %183 : vector<4xf32> to vector<4x1xf32>
      %c1_75 = arith.constant 1 : index
      %c0_76 = arith.constant 0 : index
      %c3 = arith.constant 3 : index
      %185 = vector.load %arg5[%c1_75, %c0_76, %c3] : memref<2x4x7xf32, #tpu.memory_space<vmem>>, vector<1x4x1xf32>
      %186 = vector.shape_cast %185 : vector<1x4x1xf32> to vector<4x1xf32>
      %187 = arith.maximumf %186, %184 : vector<4x1xf32>
      %c1_77 = arith.constant 1 : index
      %c0_78 = arith.constant 0 : index
      %c3_79 = arith.constant 3 : index
      %188 = vector.load %arg5[%c1_77, %c0_78, %c3_79] : memref<2x4x7xf32, #tpu.memory_space<vmem>>, vector<1x4x1xf32>
      %189 = vector.shape_cast %188 : vector<1x4x1xf32> to vector<4x1xf32>
      %190 = vector.shape_cast %187 : vector<4x1xf32> to vector<1x4x1xf32>
      tpu.vector_store %arg5[%c1_77, %c0_78, %c3_79], %190 {strides = array<i32>} : memref<2x4x7xf32, #tpu.memory_space<vmem>>, vector<1x4x1xf32>,
    } else {
    }
    %c1_i32_62 = arith.constant 1 : i32
    %149 = arith.muli %c1_i32_62, %140 : i32
    %c16_i32_63 = arith.constant 16 : i32
    %150 = arith.addi %0, %c16_i32_63 : i32
    %151 = arith.cmpi slt, %149, %150 : i32
    %152 = arith.addi %149, %138 : i32
    %153 = arith.cmpi sgt, %152, %0 : i32
    %154 = arith.andi %151, %153 : i1
    %155 = arith.extui %154 : i1 to i32
    %cst_64 = arith.constant 0xFF800000 : f32
    %c0_i32_65 = arith.constant 0 : i32
    %156 = arith.cmpi ne, %155, %c0_i32_65 : i32
    scf.if %156 {
      %173 = vector.broadcast %149 : i32 to vector<1x16xi32>
      %174 = arith.cmpi sge, %6, %173 : vector<1x16xi32>
      %175 = arith.addi %149, %138 : i32
      %176 = vector.broadcast %175 : i32 to vector<1x16xi32>
      %177 = arith.cmpi slt, %6, %176 : vector<1x16xi32>
      %178 = arith.andi %174, %177 : vector<1x16xi1>
      %179 = vector.shape_cast %178 : vector<1x16xi1> to vector<1x16xi1>
      %180 = vector.broadcast %179 : vector<1x16xi1> to vector<4x16xi1>
      %181 = vector.broadcast %cst_64 : f32 to vector<4x16xf32>
      %182 = arith.select %180, %98, %181 : vector<4x16xi1>, vector<4x16xf32>
      %cst_74 = arith.constant dense<0xFF800000> : vector<4xf32>
      %183 = vector.multi_reduction <maximumf>, %182, %cst_74 [1] : vector<4x16xf32> to vector<4xf32>
      %184 = vector.shape_cast %183 : vector<4xf32> to vector<4x1xf32>
      %c1_75 = arith.constant 1 : index
      %c0_76 = arith.constant 0 : index
      %c4 = arith.constant 4 : index
      %185 = vector.load %arg5[%c1_75, %c0_76, %c4] : memref<2x4x7xf32, #tpu.memory_space<vmem>>, vector<1x4x1xf32>
      %186 = vector.shape_cast %185 : vector<1x4x1xf32> to vector<4x1xf32>
      %187 = arith.maximumf %186, %184 : vector<4x1xf32>
      %c1_77 = arith.constant 1 : index
      %c0_78 = arith.constant 0 : index
      %c4_79 = arith.constant 4 : index
      %188 = vector.load %arg5[%c1_77, %c0_78, %c4_79] : memref<2x4x7xf32, #tpu.memory_space<vmem>>, vector<1x4x1xf32>
      %189 = vector.shape_cast %188 : vector<1x4x1xf32> to vector<4x1xf32>
      %190 = vector.shape_cast %187 : vector<4x1xf32> to vector<1x4x1xf32>
      tpu.vector_store %arg5[%c1_77, %c0_78, %c4_79], %190 {strides = array<i32>} : memref<2x4x7xf32, #tpu.memory_space<vmem>>, vector<1x4x1xf32>,
    } else {
    }
    %c2_i32_66 = arith.constant 2 : i32
    %157 = arith.muli %c2_i32_66, %140 : i32
    %c16_i32_67 = arith.constant 16 : i32
    %158 = arith.addi %0, %c16_i32_67 : i32
    %159 = arith.cmpi slt, %157, %158 : i32
    %160 = arith.addi %157, %138 : i32
    %161 = arith.cmpi sgt, %160, %0 : i32
    %162 = arith.andi %159, %161 : i1
    %163 = arith.extui %162 : i1 to i32
    %cst_68 = arith.constant 0xFF800000 : f32
    %c0_i32_69 = arith.constant 0 : i32
    %164 = arith.cmpi ne, %163, %c0_i32_69 : i32
    scf.if %164 {
      %173 = vector.broadcast %157 : i32 to vector<1x16xi32>
      %174 = arith.cmpi sge, %6, %173 : vector<1x16xi32>
      %175 = arith.addi %157, %138 : i32
      %176 = vector.broadcast %175 : i32 to vector<1x16xi32>
      %177 = arith.cmpi slt, %6, %176 : vector<1x16xi32>
      %178 = arith.andi %174, %177 : vector<1x16xi1>
      %179 = vector.shape_cast %178 : vector<1x16xi1> to vector<1x16xi1>
      %180 = vector.broadcast %179 : vector<1x16xi1> to vector<4x16xi1>
      %181 = vector.broadcast %cst_68 : f32 to vector<4x16xf32>
      %182 = arith.select %180, %98, %181 : vector<4x16xi1>, vector<4x16xf32>
      %cst_74 = arith.constant dense<0xFF800000> : vector<4xf32>
      %183 = vector.multi_reduction <maximumf>, %182, %cst_74 [1] : vector<4x16xf32> to vector<4xf32>
      %184 = vector.shape_cast %183 : vector<4xf32> to vector<4x1xf32>
      %c1_75 = arith.constant 1 : index
      %c0_76 = arith.constant 0 : index
      %c5 = arith.constant 5 : index
      %185 = vector.load %arg5[%c1_75, %c0_76, %c5] : memref<2x4x7xf32, #tpu.memory_space<vmem>>, vector<1x4x1xf32>
      %186 = vector.shape_cast %185 : vector<1x4x1xf32> to vector<4x1xf32>
      %187 = arith.maximumf %186, %184 : vector<4x1xf32>
      %c1_77 = arith.constant 1 : index
      %c0_78 = arith.constant 0 : index
      %c5_79 = arith.constant 5 : index
      %188 = vector.load %arg5[%c1_77, %c0_78, %c5_79] : memref<2x4x7xf32, #tpu.memory_space<vmem>>, vector<1x4x1xf32>
      %189 = vector.shape_cast %188 : vector<1x4x1xf32> to vector<4x1xf32>
      %190 = vector.shape_cast %187 : vector<4x1xf32> to vector<1x4x1xf32>
      tpu.vector_store %arg5[%c1_77, %c0_78, %c5_79], %190 {strides = array<i32>} : memref<2x4x7xf32, #tpu.memory_space<vmem>>, vector<1x4x1xf32>,
    } else {
    }
    %c3_i32_70 = arith.constant 3 : i32
    %165 = arith.muli %c3_i32_70, %140 : i32
    %c16_i32_71 = arith.constant 16 : i32
    %166 = arith.addi %0, %c16_i32_71 : i32
    %167 = arith.cmpi slt, %165, %166 : i32
    %168 = arith.addi %165, %138 : i32
    %169 = arith.cmpi sgt, %168, %0 : i32
    %170 = arith.andi %167, %169 : i1
    %171 = arith.extui %170 : i1 to i32
    %cst_72 = arith.constant 0xFF800000 : f32
    %c0_i32_73 = arith.constant 0 : i32
    %172 = arith.cmpi ne, %171, %c0_i32_73 : i32
    scf.if %172 {
      %173 = vector.broadcast %165 : i32 to vector<1x16xi32>
      %174 = arith.cmpi sge, %6, %173 : vector<1x16xi32>
      %175 = arith.addi %165, %138 : i32
      %176 = vector.broadcast %175 : i32 to vector<1x16xi32>
      %177 = arith.cmpi slt, %6, %176 : vector<1x16xi32>
      %178 = arith.andi %174, %177 : vector<1x16xi1>
      %179 = vector.shape_cast %178 : vector<1x16xi1> to vector<1x16xi1>
      %180 = vector.broadcast %179 : vector<1x16xi1> to vector<4x16xi1>
      %181 = vector.broadcast %cst_72 : f32 to vector<4x16xf32>
      %182 = arith.select %180, %98, %181 : vector<4x16xi1>, vector<4x16xf32>
      %cst_74 = arith.constant dense<0xFF800000> : vector<4xf32>
      %183 = vector.multi_reduction <maximumf>, %182, %cst_74 [1] : vector<4x16xf32> to vector<4xf32>
      %184 = vector.shape_cast %183 : vector<4xf32> to vector<4x1xf32>
      %c1_75 = arith.constant 1 : index
      %c0_76 = arith.constant 0 : index
      %c6 = arith.constant 6 : index
      %185 = vector.load %arg5[%c1_75, %c0_76, %c6] : memref<2x4x7xf32, #tpu.memory_space<vmem>>, vector<1x4x1xf32>
      %186 = vector.shape_cast %185 : vector<1x4x1xf32> to vector<4x1xf32>
      %187 = arith.maximumf %186, %184 : vector<4x1xf32>
      %c1_77 = arith.constant 1 : index
      %c0_78 = arith.constant 0 : index
      %c6_79 = arith.constant 6 : index
      %188 = vector.load %arg5[%c1_77, %c0_78, %c6_79] : memref<2x4x7xf32, #tpu.memory_space<vmem>>, vector<1x4x1xf32>
      %189 = vector.shape_cast %188 : vector<1x4x1xf32> to vector<4x1xf32>
      %190 = vector.shape_cast %187 : vector<4x1xf32> to vector<1x4x1xf32>
      tpu.vector_store %arg5[%c1_77, %c0_78, %c6_79], %190 {strides = array<i32>} : memref<2x4x7xf32, #tpu.memory_space<vmem>>, vector<1x4x1xf32>,
    } else {
    }
    return
  }
  func.func @transform_0(%arg0: i32, %arg1: i32, %arg2: i32, %arg3: memref<2xi32, #tpu.memory_space<smem>>) -> (i32, i32, i32) {
    %c0_i32 = arith.constant 0 : i32
    return %arg0, %arg1, %arg2 : i32, i32, i32
  }
  func.func @transform_1(%arg0: i32, %arg1: i32, %arg2: i32, %arg3: memref<2xi32, #tpu.memory_space<smem>>) -> (i32, i32, i32) {
    %c0_i32 = arith.constant 0 : i32
    %c0_i32_0 = arith.constant 0 : i32
    return %arg0, %arg1, %c0_i32 : i32, i32, i32
  }
}

</mosaic_0001>

<llo_original>
// kernel: tpu_custom_call.1
$region0: #{tpu_custom_call.1}
  #allocation0 [shape = 'u32[]', space=smem, size = 0x4, offset = 0x4, fixed_abs, tag = 'smem constant byte address 0x4 - core index']
  #allocation1 [shape = 'u32[72,128]{1,0:T(1,128)}', space=vmem, size = 0x9000, scoped, tag = 'internal scratch']
  #allocation2 [shape = 's32[1]{0}', space=sflag, size = 0x4, scoped, tag = 'scoped memory for tpu_custom_call.1']
  #allocation3 [shape = 'u8[512]{0}', space=smem, size = 0x200, scoped, tag = 'prefetched SMEM operand 0']
  %s0 = inlined_call_operand.hbm [shape: s32[2], index: 0, kind: input, shape index: {}]
  %s1 = inlined_call_operand.hbm [shape: f32[2,4,16], index: 1, kind: input, shape index: {}]
  %s2 = inlined_call_operand.hbm [shape: f32[2,4,7], index: 2, kind: output, shape index: {}]
  %s3 = sld [smem:[#allocation0]]
  $region78: #{tpu_custom_call.1} parent=0
    _
  %s5 = ssub.s32 1, %s3
  %s6 = scalar_select 0, %s5, %s3
  %s8 = sshll.u32 %s0, 4
  %s9 = int_to_ptr.hbm [resolvable:$true] %s8
  %11 = dma.hbm_to_smem %s9, 16, [#allocation3], [#allocation2]
  %13 = dma.done [#allocation2], 16
  %14 = sfence
  $region1: #{tpu_custom_call.1} parent=0
    #allocation4 [shape = 'u8[4096]{0}', space=vmem, size = 0x1000, scoped, tag = 'input window, operand 1, single buffered']
    #allocation5 [shape = 's32[1]{0}', space=sflag, size = 0x4, scoped, tag = 'scoped memory for tpu_custom_call.1']
    #allocation6 [shape = 's32[1]{0}', space=sflag, size = 0x4, scoped, tag = 'scoped memory for tpu_custom_call.1']
    #allocation7 [shape = 'u8[4096]{0}', space=vmem, size = 0x1000, scoped, tag = 'output window, operand 0, single buffered']
    %15 = vsyncpa [#allocation5], 0
    %16 = vsyncpa [#allocation6], 0
    // Predicated region
    $region2: #{tpu_custom_call.1} parent=1 // pred_check
      _
    $region3: #{tpu_custom_call.1} parent=1 // pred_check_branch
      %18 = sbr.rel (0) target = $region5
    $region4: #{tpu_custom_call.1} parent=1 // pred_region
      %20 = vsyncadd [#allocation5], 0
      %s21 = sshll.u32 %s1, 4
      %s22 = int_to_ptr.hbm [resolvable:$true] %s21
      %s23 = sshll.u32 [#allocation4], 4
      %s24 = int_to_ptr.vmem [resolvable:$true] %s23
      %29 = dma.hbm_to_vmem [thread:$0]  %s22, 128, %s24, [#allocation5], 64, 64, 4
    $region5: #{tpu_custom_call.1} parent=1 // pred_fallthru
      _
    // Predicated region
    $region6: #{tpu_custom_call.1} parent=1 // pred_check
      _
    $region7: #{tpu_custom_call.1} parent=1 // pred_check_branch
      %31 = sbr.rel (0) target = $region9
    $region8: #{tpu_custom_call.1} parent=1 // pred_region
      %33 = dma.done [#allocation5], 128
    $region9: #{tpu_custom_call.1} parent=1 // pred_fallthru
      _
    %s34 = smul.u32 0, 16
    %p35 = scmp.eq.s32.totalorder 0, 0
    // Predicated region
    $region10: #{tpu_custom_call.1} parent=1 // pred_check
      %p36 = pneg %p35
    $region11: #{tpu_custom_call.1} parent=1 // pred_check_branch
      %38 = sbr.rel (%p36) target = $region13
    $region12: #{tpu_custom_call.1} parent=1 // pred_region
      %vm39 = vcmask 52224
      %40 = vst.msk [vmem:[#allocation7] sm:$0xf] %vm39, -inf
      %41 = vst.msk [vmem:[#allocation7 + $0x4] sm:$0xf] %vm39, -inf
    $region13: #{tpu_custom_call.1} parent=1 // pred_fallthru
      _
    %v42 = vlaneseq
    %v43 = vand.u32 %v42, 127
    %v44 = vstv %s34
    %v45 = vadd.s32 %v44, %v43
    %s46 = smul.u32 0, 2
    %s47 = sld [smem:[#allocation3 + %s46]]
    %p48 = scmp.gt.s32.totalorder %s47, 1
    %s49 = scalar_select %p48, %s47, 1
    %p50 = scmp.lt.s32.totalorder %s49, 16
    %s51 = scalar_select %p50, %s49, 16
    %v52 = vld [vmem:[#allocation4] sm:$0xf]
    %s53 = scvt.s32.f32 %s51
    %s54 = sceil.f32 %s53
    %s55 = scvt.f32.s32.to.zero.pseudo %s54
    %s56 = sadd.s32 %s34, 16
    %p57 = scmp.gt.s32.totalorder %s56, 0
    %p58 = scmp.gt.s32.totalorder %s55, %s34
    %p59 = pnand %p57, %p58
    %p60 = pneg %p59
    // Predicated region
    $region14: #{tpu_custom_call.1} parent=1 // pred_check
      _
    $region15: #{tpu_custom_call.1} parent=1 // pred_check_branch
      %62 = sbr.rel (%p59) target = $region17
    $region16: #{tpu_custom_call.1} parent=1 // pred_region
      %vm63 = vcmp.ge.s32.totalorder %v45, 0
      %v64 = vstv %s55
      %vm65 = vcmp.lt.s32.totalorder %v45, %v64
      %vm66 = vmand %vm63, %vm65
      %v67 = vsel %vm66, 1, 0
      %vm68 = vcmp.eq.s32.totalorder %v67, 1
      %v69 = vsel %vm68, %v52, -inf
      %vm70 = vcmask 125952
      %v71 = vsel %vm70, %v69, -inf
      %72 = vmax.xlane.f32.xlu0 %v71
      %v73 = vpop.xlane.xlu0 %72
      %v74 = vld [vmem:[#allocation7] sm:$0xf]
      %v75 = vmax.f32 %v74, %v73
      %vm76 = vcmask 3072
      %77 = vst.msk [vmem:[#allocation7] sm:$0xf] %vm76, %v75
    $region17: #{tpu_custom_call.1} parent=1 // pred_fallthru
      _
    %v78 = vrcp.pop 2.0
    %v79 = vmul.f32 2.0, %v78
    %v80 = vsub.f32 1.0, %v79
    %v81 = vmul.f32 %v78, %v80
    %v82 = vadd.f32 %v78, %v81
    %vm83 = vweird.f32 %v78
    %v84 = vsel %vm83, %v78, %v82
    %s85 = vtos %v84
    %s86 = smul.f32 %s53, %s85
    %s87 = sceil.f32 %s86
    %s88 = scvt.f32.s32.to.zero.pseudo %s87
    %s89 = sfloor.f32 %s86
    %s90 = scvt.f32.s32.to.zero.pseudo %s89
    %p91 = scmp.gt.s32.totalorder %s88, %s34
    %p92 = pnand %p57, %p91
    %p93 = pneg %p92
    // Predicated region
    $region18: #{tpu_custom_call.1} parent=1 // pred_check
      _
    $region19: #{tpu_custom_call.1} parent=1 // pred_check_branch
      %95 = sbr.rel (%p92) target = $region21
    $region20: #{tpu_custom_call.1} parent=1 // pred_region
      %vm96 = vcmp.ge.s32.totalorder %v45, 0
      %v97 = vstv %s88
      %vm98 = vcmp.lt.s32.totalorder %v45, %v97
      %vm99 = vmand %vm96, %vm98
      %v100 = vsel %vm99, 1, 0
      %vm101 = vcmp.eq.s32.totalorder %v100, 1
      %v102 = vsel %vm101, %v52, -inf
      %vm103 = vcmask 125952
      %v104 = vsel %vm103, %v102, -inf
      %105 = vmax.xlane.f32.xlu0 %v104
      %v106 = vpop.xlane.xlu0 %105
      %v107 = vld [vmem:[#allocation7] sm:$0xf]
      %v108 = vmax.f32 %v107, %v106
      %vm109 = vcmask 11272
      %110 = vst.msk [vmem:[#allocation7] sm:$0xf] %vm109, %v108
    $region21: #{tpu_custom_call.1} parent=1 // pred_fallthru
      _
    %p111 = scmp.lt.s32.totalorder %s90, %s56
    %s112 = sadd.s32 %s90, %s88
    %p113 = scmp.gt.s32.totalorder %s112, %s34
    %p114 = pnand %p111, %p113
    %p115 = pneg %p114
    // Predicated region
    $region22: #{tpu_custom_call.1} parent=1 // pred_check
      _
    $region23: #{tpu_custom_call.1} parent=1 // pred_check_branch
      %117 = sbr.rel (%p114) target = $region25
    $region24: #{tpu_custom_call.1} parent=1 // pred_region
      %v118 = vstv %s90
      %vm119 = vcmp.ge.s32.totalorder %v45, %v118
      %v120 = vstv %s112
      %vm121 = vcmp.lt.s32.totalorder %v45, %v120
      %vm122 = vmand %vm119, %vm121
      %v123 = vsel %vm122, 1, 0
      %vm124 = vcmp.eq.s32.totalorder %v123, 1
      %v125 = vsel %vm124, %v52, -inf
      %vm126 = vcmask 125952
      %v127 = vsel %vm126, %v125, -inf
      %128 = vmax.xlane.f32.xlu0 %v127
      %v129 = vpop.xlane.xlu0 %128
      %v130 = vld [vmem:[#allocation7] sm:$0xf]
      %v131 = vmax.f32 %v130, %v129
      %vm132 = vcmask 19472
      %133 = vst.msk [vmem:[#allocation7] sm:$0xf] %vm132, %v131
    $region25: #{tpu_custom_call.1} parent=1 // pred_fallthru
      _
    %v134 = vrcp.pop 4.0
    %v135 = vmul.f32 4.0, %v134
    %v136 = vsub.f32 1.0, %v135
    %v137 = vmul.f32 %v134, %v136
    %v138 = vadd.f32 %v134, %v137
    %vm139 = vweird.f32 %v134
    %v140 = vsel %vm139, %v134, %v138
    %s141 = vtos %v140
    %s142 = smul.f32 %s53, %s141
    %s143 = sceil.f32 %s142
    %s144 = scvt.f32.s32.to.zero.pseudo %s143
    %s145 = sfloor.f32 %s142
    %s146 = scvt.f32.s32.to.zero.pseudo %s145
    %p147 = scmp.gt.s32.totalorder %s144, %s34
    %p148 = pnand %p57, %p147
    %p149 = pneg %p148
    // Predicated region
    $region26: #{tpu_custom_call.1} parent=1 // pred_check
      _
    $region27: #{tpu_custom_call.1} parent=1 // pred_check_branch
      %151 = sbr.rel (%p148) target = $region29
    $region28: #{tpu_custom_call.1} parent=1 // pred_region
      %vm152 = vcmp.ge.s32.totalorder %v45, 0
      %v153 = vstv %s144
      %vm154 = vcmp.lt.s32.totalorder %v45, %v153
      %vm155 = vmand %vm152, %vm154
      %v156 = vsel %vm155, 1, 0
      %vm157 = vcmp.eq.s32.totalorder %v156, 1
      %v158 = vsel %vm157, %v52, -inf
      %vm159 = vcmask 125952
      %v160 = vsel %vm159, %v158, -inf
      %161 = vmax.xlane.f32.xlu0 %v160
      %v162 = vpop.xlane.xlu0 %161
      %v163 = vld [vmem:[#allocation7] sm:$0xf]
      %v164 = vmax.f32 %v163, %v162
      %vm165 = vcmask 27672
      %166 = vst.msk [vmem:[#allocation7] sm:$0xf] %vm165, %v164
    $region29: #{tpu_custom_call.1} parent=1 // pred_fallthru
      _
    %p167 = scmp.lt.s32.totalorder %s146, %s56
    %s168 = sadd.s32 %s146, %s144
    %p169 = scmp.gt.s32.totalorder %s168, %s34
    %p170 = pnand %p167, %p169
    %p171 = pneg %p170
    // Predicated region
    $region30: #{tpu_custom_call.1} parent=1 // pred_check
      _
    $region31: #{tpu_custom_call.1} parent=1 // pred_check_branch
      %173 = sbr.rel (%p170) target = $region33
    $region32: #{tpu_custom_call.1} parent=1 // pred_region
      %v174 = vstv %s146
      %vm175 = vcmp.ge.s32.totalorder %v45, %v174
      %v176 = vstv %s168
      %vm177 = vcmp.lt.s32.totalorder %v45, %v176
      %vm178 = vmand %vm175, %vm177
      %v179 = vsel %vm178, 1, 0
      %vm180 = vcmp.eq.s32.totalorder %v179, 1
      %v181 = vsel %vm180, %v52, -inf
      %vm182 = vcmask 125952
      %v183 = vsel %vm182, %v181, -inf
      %184 = vmax.xlane.f32.xlu0 %v183
      %v185 = vpop.xlane.xlu0 %184
      %v186 = vld [vmem:[#allocation7] sm:$0xf]
      %v187 = vmax.f32 %v186, %v185
      %vm188 = vcmask 35872
      %189 = vst.msk [vmem:[#allocation7] sm:$0xf] %vm188, %v187
    $region33: #{tpu_custom_call.1} parent=1 // pred_fallthru
      _
    %s190 = smul.u32 %s146, 2
    %p191 = scmp.lt.s32.totalorder %s190, %s56
    %s192 = sadd.s32 %s190, %s144
    %p193 = scmp.gt.s32.totalorder %s192, %s34
    %p194 = pnand %p191, %p193
    %p195 = pneg %p194
    // Predicated region
    $region34: #{tpu_custom_call.1} parent=1 // pred_check
      _
    $region35: #{tpu_custom_call.1} parent=1 // pred_check_branch
      %197 = sbr.rel (%p194) target = $region37
    $region36: #{tpu_custom_call.1} parent=1 // pred_region
      %v198 = vstv %s190
      %vm199 = vcmp.ge.s32.totalorder %v45, %v198
      %v200 = vstv %s192
      %vm201 = vcmp.lt.s32.totalorder %v45, %v200
      %vm202 = vmand %vm199, %vm201
      %v203 = vsel %vm202, 1, 0
      %vm204 = vcmp.eq.s32.totalorder %v203, 1
      %v205 = vsel %vm204, %v52, -inf
      %vm206 = vcmask 125952
      %v207 = vsel %vm206, %v205, -inf
      %208 = vmax.xlane.f32.xlu0 %v207
      %v209 = vpop.xlane.xlu0 %208
      %v210 = vld [vmem:[#allocation7] sm:$0xf]
      %v211 = vmax.f32 %v210, %v209
      %vm212 = vcmask 44072
      %213 = vst.msk [vmem:[#allocation7] sm:$0xf] %vm212, %v211
    $region37: #{tpu_custom_call.1} parent=1 // pred_fallthru
      _
    %s214 = smul.u32 %s146, 3
    %p215 = scmp.lt.s32.totalorder %s214, %s56
    %s216 = sadd.s32 %s214, %s144
    %p217 = scmp.gt.s32.totalorder %s216, %s34
    %p218 = pnand %p215, %p217
    %p219 = pneg %p218
    // Predicated region
    $region38: #{tpu_custom_call.1} parent=1 // pred_check
      _
    $region39: #{tpu_custom_call.1} parent=1 // pred_check_branch
      %221 = sbr.rel (%p218) target = $region41
    $region40: #{tpu_custom_call.1} parent=1 // pred_region
      %v222 = vstv %s214
      %vm223 = vcmp.ge.s32.totalorder %v45, %v222
      %v224 = vstv %s216
      %vm225 = vcmp.lt.s32.totalorder %v45, %v224
      %vm226 = vmand %vm223, %vm225
      %v227 = vsel %vm226, 1, 0
      %vm228 = vcmp.eq.s32.totalorder %v227, 1
      %v229 = vsel %vm228, %v52, -inf
      %vm230 = vcmask 125952
      %v231 = vsel %vm230, %v229, -inf
      %232 = vmax.xlane.f32.xlu0 %v231
      %v233 = vpop.xlane.xlu0 %232
      %v234 = vld [vmem:[#allocation7] sm:$0xf]
      %v235 = vmax.f32 %v234, %v233
      %vm236 = vcmask 52272
      %237 = vst.msk [vmem:[#allocation7] sm:$0xf] %vm236, %v235
    $region41: #{tpu_custom_call.1} parent=1 // pred_fallthru
      _
    %s238 = sadd.s32 %s46, 1
    %s239 = sld [smem:[#allocation3 + %s238]]
    %p240 = scmp.gt.s32.totalorder %s239, 1
    %s241 = scalar_select %p240, %s239, 1
    %p242 = scmp.lt.s32.totalorder %s241, 16
    %s243 = scalar_select %p242, %s241, 16
    %s244 = scalar_lea.vmem [#allocation4], 4
    %v245 = vld [vmem:[%s244] sm:$0xf]
    %s246 = scvt.s32.f32 %s243
    %s247 = sceil.f32 %s246
    %s248 = scvt.f32.s32.to.zero.pseudo %s247
    %p249 = scmp.gt.s32.totalorder %s248, %s34
    %p250 = pnand %p57, %p249
    %p251 = pneg %p250
    // Predicated region
    $region42: #{tpu_custom_call.1} parent=1 // pred_check
      _
    $region43: #{tpu_custom_call.1} parent=1 // pred_check_branch
      %253 = sbr.rel (%p250) target = $region45
    $region44: #{tpu_custom_call.1} parent=1 // pred_region
      %vm254 = vcmp.ge.s32.totalorder %v45, 0
      %v255 = vstv %s248
      %vm256 = vcmp.lt.s32.totalorder %v45, %v255
      %vm257 = vmand %vm254, %vm256
      %v258 = vsel %vm257, 1, 0
      %vm259 = vcmp.eq.s32.totalorder %v258, 1
      %v260 = vsel %vm259, %v245, -inf
      %vm261 = vcmask 125952
      %v262 = vsel %vm261, %v260, -inf
      %263 = vmax.xlane.f32.xlu0 %v262
      %v264 = vpop.xlane.xlu0 %263
      %s265 = scalar_lea.vmem [#allocation7], 4
      %v266 = vld [vmem:[%s265] sm:$0xf]
      %v267 = vmax.f32 %v266, %v264
      %vm268 = vcmask 3072
      %269 = vst.msk [vmem:[%s265] sm:$0xf] %vm268, %v267
    $region45: #{tpu_custom_call.1} parent=1 // pred_fallthru
      _
    %v270 = vrcp.pop 2.0
    %v271 = vmul.f32 2.0, %v270
    %v272 = vsub.f32 1.0, %v271
    %v273 = vmul.f32 %v270, %v272
    %v274 = vadd.f32 %v270, %v273
    %vm275 = vweird.f32 %v270
    %v276 = vsel %vm275, %v270, %v274
    %s277 = vtos %v276
    %s278 = smul.f32 %s246, %s277
    %s279 = sceil.f32 %s278
    %s280 = scvt.f32.s32.to.zero.pseudo %s279
    %s281 = sfloor.f32 %s278
    %s282 = scvt.f32.s32.to.zero.pseudo %s281
    %p283 = scmp.gt.s32.totalorder %s280, %s34
    %p284 = pnand %p57, %p283
    %p285 = pneg %p284
    // Predicated region
    $region46: #{tpu_custom_call.1} parent=1 // pred_check
      _
    $region47: #{tpu_custom_call.1} parent=1 // pred_check_branch
      %287 = sbr.rel (%p284) target = $region49
    $region48: #{tpu_custom_call.1} parent=1 // pred_region
      %vm288 = vcmp.ge.s32.totalorder %v45, 0
      %v289 = vstv %s280
      %vm290 = vcmp.lt.s32.totalorder %v45, %v289
      %vm291 = vmand %vm288, %vm290
      %v292 = vsel %vm291, 1, 0
      %vm293 = vcmp.eq.s32.totalorder %v292, 1
      %v294 = vsel %vm293, %v245, -inf
      %vm295 = vcmask 125952
      %v296 = vsel %vm295, %v294, -inf
      %297 = vmax.xlane.f32.xlu0 %v296
      %v298 = vpop.xlane.xlu0 %297
      %s299 = scalar_lea.vmem [#allocation7], 4
      %v300 = vld [vmem:[%s299] sm:$0xf]
      %v301 = vmax.f32 %v300, %v298
      %vm302 = vcmask 11272
      %303 = vst.msk [vmem:[%s299] sm:$0xf] %vm302, %v301
    $region49: #{tpu_custom_call.1} parent=1 // pred_fallthru
      _
    %p304 = scmp.lt.s32.totalorder %s282, %s56
    %s305 = sadd.s32 %s282, %s280
    %p306 = scmp.gt.s32.totalorder %s305, %s34
    %p307 = pnand %p304, %p306
    %p308 = pneg %p307
    // Predicated region
    $region50: #{tpu_custom_call.1} parent=1 // pred_check
      _
    $region51: #{tpu_custom_call.1} parent=1 // pred_check_branch
      %310 = sbr.rel (%p307) target = $region53
    $region52: #{tpu_custom_call.1} parent=1 // pred_region
      %v311 = vstv %s282
      %vm312 = vcmp.ge.s32.totalorder %v45, %v311
      %v313 = vstv %s305
      %vm314 = vcmp.lt.s32.totalorder %v45, %v313
      %vm315 = vmand %vm312, %vm314
      %v316 = vsel %vm315, 1, 0
      %vm317 = vcmp.eq.s32.totalorder %v316, 1
      %v318 = vsel %vm317, %v245, -inf
      %vm319 = vcmask 125952
      %v320 = vsel %vm319, %v318, -inf
      %321 = vmax.xlane.f32.xlu0 %v320
      %v322 = vpop.xlane.xlu0 %321
      %s323 = scalar_lea.vmem [#allocation7], 4
      %v324 = vld [vmem:[%s323] sm:$0xf]
      %v325 = vmax.f32 %v324, %v322
      %vm326 = vcmask 19472
      %327 = vst.msk [vmem:[%s323] sm:$0xf] %vm326, %v325
    $region53: #{tpu_custom_call.1} parent=1 // pred_fallthru
      _
    %v328 = vrcp.pop 4.0
    %v329 = vmul.f32 4.0, %v328
    %v330 = vsub.f32 1.0, %v329
    %v331 = vmul.f32 %v328, %v330
    %v332 = vadd.f32 %v328, %v331
    %vm333 = vweird.f32 %v328
    %v334 = vsel %vm333, %v328, %v332
    %s335 = vtos %v334
    %s336 = smul.f32 %s246, %s335
    %s337 = sceil.f32 %s336
    %s338 = scvt.f32.s32.to.zero.pseudo %s337
    %s339 = sfloor.f32 %s336
    %s340 = scvt.f32.s32.to.zero.pseudo %s339
    %p341 = scmp.gt.s32.totalorder %s338, %s34
    %p342 = pnand %p57, %p341
    %p343 = pneg %p342
    // Predicated region
    $region54: #{tpu_custom_call.1} parent=1 // pred_check
      _
    $region55: #{tpu_custom_call.1} parent=1 // pred_check_branch
      %345 = sbr.rel (%p342) target = $region57
    $region56: #{tpu_custom_call.1} parent=1 // pred_region
      %vm346 = vcmp.ge.s32.totalorder %v45, 0
      %v347 = vstv %s338
      %vm348 = vcmp.lt.s32.totalorder %v45, %v347
      %vm349 = vmand %vm346, %vm348
      %v350 = vsel %vm349, 1, 0
      %vm351 = vcmp.eq.s32.totalorder %v350, 1
      %v352 = vsel %vm351, %v245, -inf
      %vm353 = vcmask 125952
      %v354 = vsel %vm353, %v352, -inf
      %355 = vmax.xlane.f32.xlu0 %v354
      %v356 = vpop.xlane.xlu0 %355
      %s357 = scalar_lea.vmem [#allocation7], 4
      %v358 = vld [vmem:[%s357] sm:$0xf]
      %v359 = vmax.f32 %v358, %v356
      %vm360 = vcmask 27672
      %361 = vst.msk [vmem:[%s357] sm:$0xf] %vm360, %v359
    $region57: #{tpu_custom_call.1} parent=1 // pred_fallthru
      _
    %p362 = scmp.lt.s32.totalorder %s340, %s56
    %s363 = sadd.s32 %s340, %s338
    %p364 = scmp.gt.s32.totalorder %s363, %s34
    %p365 = pnand %p362, %p364
    %p366 = pneg %p365
    // Predicated region
    $region58: #{tpu_custom_call.1} parent=1 // pred_check
      _
    $region59: #{tpu_custom_call.1} parent=1 // pred_check_branch
      %368 = sbr.rel (%p365) target = $region61
    $region60: #{tpu_custom_call.1} parent=1 // pred_region
      %v369 = vstv %s340
      %vm370 = vcmp.ge.s32.totalorder %v45, %v369
      %v371 = vstv %s363
      %vm372 = vcmp.lt.s32.totalorder %v45, %v371
      %vm373 = vmand %vm370, %vm372
      %v374 = vsel %vm373, 1, 0
      %vm375 = vcmp.eq.s32.totalorder %v374, 1
      %v376 = vsel %vm375, %v245, -inf
      %vm377 = vcmask 125952
      %v378 = vsel %vm377, %v376, -inf
      %379 = vmax.xlane.f32.xlu0 %v378
      %v380 = vpop.xlane.xlu0 %379
      %s381 = scalar_lea.vmem [#allocation7], 4
      %v382 = vld [vmem:[%s381] sm:$0xf]
      %v383 = vmax.f32 %v382, %v380
      %vm384 = vcmask 35872
      %385 = vst.msk [vmem:[%s381] sm:$0xf] %vm384, %v383
    $region61: #{tpu_custom_call.1} parent=1 // pred_fallthru
      _
    %s386 = smul.u32 %s340, 2
    %p387 = scmp.lt.s32.totalorder %s386, %s56
    %s388 = sadd.s32 %s386, %s338
    %p389 = scmp.gt.s32.totalorder %s388, %s34
    %p390 = pnand %p387, %p389
    %p391 = pneg %p390
    // Predicated region
    $region62: #{tpu_custom_call.1} parent=1 // pred_check
      _
    $region63: #{tpu_custom_call.1} parent=1 // pred_check_branch
      %393 = sbr.rel (%p390) target = $region65
    $region64: #{tpu_custom_call.1} parent=1 // pred_region
      %v394 = vstv %s386
      %vm395 = vcmp.ge.s32.totalorder %v45, %v394
      %v396 = vstv %s388
      %vm397 = vcmp.lt.s32.totalorder %v45, %v396
      %vm398 = vmand %vm395, %vm397
      %v399 = vsel %vm398, 1, 0
      %vm400 = vcmp.eq.s32.totalorder %v399, 1
      %v401 = vsel %vm400, %v245, -inf
      %vm402 = vcmask 125952
      %v403 = vsel %vm402, %v401, -inf
      %404 = vmax.xlane.f32.xlu0 %v403
      %v405 = vpop.xlane.xlu0 %404
      %s406 = scalar_lea.vmem [#allocation7], 4
      %v407 = vld [vmem:[%s406] sm:$0xf]
      %v408 = vmax.f32 %v407, %v405
      %vm409 = vcmask 44072
      %410 = vst.msk [vmem:[%s406] sm:$0xf] %vm409, %v408
    $region65: #{tpu_custom_call.1} parent=1 // pred_fallthru
      _
    %s411 = smul.u32 %s340, 3
    %p412 = scmp.lt.s32.totalorder %s411, %s56
    %s413 = sadd.s32 %s411, %s338
    %p414 = scmp.gt.s32.totalorder %s413, %s34
    %p415 = pnand %p412, %p414
    %p416 = pneg %p415
    // Predicated region
    $region66: #{tpu_custom_call.1} parent=1 // pred_check
      _
    $region67: #{tpu_custom_call.1} parent=1 // pred_check_branch
      %418 = sbr.rel (%p415) target = $region69
    $region68: #{tpu_custom_call.1} parent=1 // pred_region
      %v419 = vstv %s411
      %vm420 = vcmp.ge.s32.totalorder %v45, %v419
      %v421 = vstv %s413
      %vm422 = vcmp.lt.s32.totalorder %v45, %v421
      %vm423 = vmand %vm420, %vm422
      %v424 = vsel %vm423, 1, 0
      %vm425 = vcmp.eq.s32.totalorder %v424, 1
      %v426 = vsel %vm425, %v245, -inf
      %vm427 = vcmask 125952
      %v428 = vsel %vm427, %v426, -inf
      %429 = vmax.xlane.f32.xlu0 %v428
      %v430 = vpop.xlane.xlu0 %429
      %s431 = scalar_lea.vmem [#allocation7], 4
      %v432 = vld [vmem:[%s431] sm:$0xf]
      %v433 = vmax.f32 %v432, %v430
      %vm434 = vcmask 52272
      %435 = vst.msk [vmem:[%s431] sm:$0xf] %vm434, %v433
    $region69: #{tpu_custom_call.1} parent=1 // pred_fallthru
      _
    // Predicated region
    $region70: #{tpu_custom_call.1} parent=1 // pred_check
      _
    $region71: #{tpu_custom_call.1} parent=1 // pred_check_branch
      %437 = sbr.rel (0) target = $region73
    $region72: #{tpu_custom_call.1} parent=1 // pred_region
      %439 = vsyncadd [#allocation6], 0
      %s440 = sshll.u32 [#allocation7], 4
      %s441 = int_to_ptr.vmem [resolvable:$true] %s440
      %s442 = sshll.u32 %s2, 4
      %s443 = int_to_ptr.hbm [resolvable:$true] %s442
      %448 = dma.vmem_to_hbm [thread:$0]  %s441, 128, %s443, [#allocation6], 64, 64, 4
    $region73: #{tpu_custom_call.1} parent=1 // pred_fallthru
      _
    // Predicated region
    $region74: #{tpu_custom_call.1} parent=1 // pred_check
      _
    $region75: #{tpu_custom_call.1} parent=1 // pred_check_branch
      %450 = sbr.rel (0) target = $region77
    $region76: #{tpu_custom_call.1} parent=1 // pred_region
      %452 = dma.done [#allocation6], 128
    $region77: #{tpu_custom_call.1} parent=1 // pred_fallthru
      _
    %453 = vsyncpa [#allocation5], 1
    %454 = vsyncpa [#allocation6], 1

</llo_original>
